<compile_context>
chip_gen: v6e
topology: v6e:2x2x1
jax: 0.10.0
libtpu: 0.0.40
codegen_flags: <defaults>
</compile_context>

<pallas_src>
import functools

import jax
import jax.numpy as jnp
from jax.experimental import pallas as pl
from jax.experimental.pallas import tpu as pltpu


def _round_up(x, m):
    return ((x + m - 1) // m) * m


def _cdiv(a, b):
    return -(-a // b)


def _make_kernel(num_layers):
    """Kernel ref order: x, w_bcast, (W0, b0, W1, b1, ...), out."""

    def kernel(x_ref, w_ref, *refs):
        out_ref = refs[-1]
        wb = refs[:-1]
        # Concept aggregation on the VPU/XLU (hides under the x DMA):
        #   agg[b, e] = sum_c w[c] * x[b, c, e]
        agg = jnp.sum(x_ref[...] * w_ref[...], axis=1)            # (TB, E) f32
        h = agg
        for i in range(num_layers):
            W = wb[2 * i][...]                                    # (K_i, N_i)
            b = wb[2 * i + 1][...]                                # (1, N_i)
            h = jnp.dot(h, W, preferred_element_type=jnp.float32) + b
            if i < num_layers - 1:
                h = jnp.maximum(h, 0.0)                           # ReLU between layers
        out_ref[...] = h.astype(out_ref.dtype)                    # lane-dense (TB, 128k)

    return kernel


@functools.partial(jax.jit, static_argnames=("num_classes", "tile_batch"))
def linear_aggregator_forward(x, w, mlp_weights, mlp_biases, *, num_classes,
                              tile_batch=None):
    """x: (B, C, E), w: (C,), mlp_weights[i]: (in_i, out_i), mlp_biases[i]: (out_i,)."""
    B, C, E = x.shape
    num_layers = len(mlp_weights)
    assert num_layers >= 1
    x_itemsize = x.dtype.itemsize

    # ---- per-generation VMEM budget -----------------------------------------
    try:
        vmem_cap = int(pltpu.get_tpu_info().vmem_capacity_bytes)
    except Exception:  # conservative fallback: v7x's 64 MiB per-TC VMEM
        vmem_cap = 64 * 1024 * 1024
    vmem_budget = int(0.80 * vmem_cap)      # leave headroom for compiler scratch
    if tile_batch is None:
        # Bigger tiles on 128 MiB chips (v5e/v6e); smaller on v7x's 64 MiB.
        tile_batch = 512 if vmem_cap >= (100 << 20) else 256

    # ---- parameters: lane-dense output (pad last-layer N to multiple of 128) -
    n_pad = _round_up(max(num_classes, 1), 128)
    W_last = mlp_weights[-1]
    b_last = mlp_biases[-1]
    pad_n = n_pad - W_last.shape[1]
    weights = list(mlp_weights[:-1]) + [jnp.pad(W_last, ((0, 0), (0, pad_n)))]
    biases = list(mlp_biases[:-1]) + [jnp.pad(b_last, ((0, pad_n),))]
    biases2 = [b.reshape(1, -1) for b in biases]                 # 2-D, lane axis last
    # Concept weights broadcast to (1, C, E) so the in-kernel multiply
    # broadcasts straight over the batch tile.
    w_bcast = jnp.broadcast_to(w.astype(x.dtype)[None, :, None], (1, C, E))

    param_arrays = [w_bcast] + weights + biases2
    # Pallas double-buffers every input by default, even constant-index ones.
    param_bytes = 2 * sum(int(a.size) * a.dtype.itemsize for a in param_arrays)

    # ---- derive the batch tile from the VMEM budget ---------------------------
    def step_bytes(tb):
        return (2 * tb * C * E * x_itemsize      # x tile, double-buffered
                + 2 * tb * n_pad * 4             # out tile, double-buffered
                + param_bytes)                   # resident params (double-buffered)

    TB = min(_round_up(max(int(tile_batch), 8), 8), _round_up(B, 8))
    while TB > 8 and step_bytes(TB) > vmem_budget:
        TB = _round_up(TB // 2, 8)
    # Minimize batch zero-padding: spread B as evenly as possible over tiles.
    n_tiles = _cdiv(B, TB)
    TB = _round_up(_cdiv(B, n_tiles), 8)
    # Give the "parallel" axis >= 2 grid steps so v7x can use both TensorCores.
    if _cdiv(B, TB) < 2 and TB >= 16:
        TB = _round_up(_cdiv(B, 2), 8)
    B_pad = _round_up(B, TB)
    grid = (B_pad // TB,)

    x_p = x if B_pad == B else jnp.pad(x, ((0, B_pad - B), (0, 0), (0, 0)))

    operands = [x_p, w_bcast]
    in_specs = [pl.BlockSpec((TB, C, E), lambda i: (i, 0, 0)),
                pl.BlockSpec((1, C, E), lambda i: (0, 0, 0))]
    for W, b in zip(weights, biases2):
        operands += [W, b]
        # Constant index_map -> weights/biases stay VMEM-resident across steps.
        in_specs += [pl.BlockSpec(W.shape, lambda i: (0, 0)),
                     pl.BlockSpec(b.shape, lambda i: (0, 0))]

    need = step_bytes(TB)
    vmem_limit = min(max(32 * 1024 * 1024, int(need * 1.2) + (1 << 20)),
                     max(vmem_budget, 32 * 1024 * 1024))

    # Advisory cost estimate: aggregation + per-layer matmuls, HBM bytes moved.
    flops = 2 * B_pad * C * E
    for W in weights:
        flops += 2 * B_pad * int(W.shape[0]) * int(W.shape[1])
    bytes_accessed = (B_pad * C * E * x_itemsize
                      + B_pad * n_pad * 4
                      + param_bytes // 2)
    cost = pl.CostEstimate(flops=flops, transcendentals=0,
                           bytes_accessed=bytes_accessed)

    out = pl.pallas_call(
        _make_kernel(num_layers),
        out_shape=jax.ShapeDtypeStruct((B_pad, n_pad), jnp.float32),
        grid_spec=pltpu.PrefetchScalarGridSpec(
            num_scalar_prefetch=0,
            grid=grid,
            in_specs=in_specs,
            out_specs=pl.BlockSpec((TB, n_pad), lambda i: (i, 0)),
        ),
        compiler_params=pltpu.CompilerParams(
            dimension_semantics=("parallel",),
            vmem_limit_bytes=vmem_limit,
        ),
        cost_estimate=cost,
    )(*operands)

    return out[:B, :num_classes]


def reference_forward(x, w, mlp_weights, mlp_biases):
    agg = jnp.einsum("bce,c->be", x, w)
    h = agg
    n = len(mlp_weights)
    for i, (W, b) in enumerate(zip(mlp_weights, mlp_biases)):
        h = h @ W + b
        if i < n - 1:
            h = jnp.maximum(h, 0.0)
    return h


if __name__ == "__main__":
    # Module hyper-parameters (small, consistent with the forward signature).
    batch_size = 2
    num_concepts = 4
    emb_size = 32
    mlp_num_layers = 2
    num_classes = 3

    key = jax.random.PRNGKey(0)
    k_x, k_w, k_w0, k_b0, k_w1, k_b1 = jax.random.split(key, 6)

    # Input: (batch, num_concepts, emb_size)
    x = jax.random.normal(k_x, (batch_size, num_concepts, emb_size), dtype=jnp.float32)

    # Parameters: nn.Parameter(torch.randn(num_concepts)) and an MLP
    # emb_size -> emb_size -> num_classes with ReLU in between.
    w = jax.random.normal(k_w, (num_concepts,), dtype=jnp.float32)
    mlp_weights = [
        jax.random.normal(k_w0, (emb_size, emb_size), dtype=jnp.float32) * 0.1,
        jax.random.normal(k_w1, (emb_size, num_classes), dtype=jnp.float32) * 0.1,
    ]
    mlp_biases = [
        jax.random.normal(k_b0, (emb_size,), dtype=jnp.float32) * 0.1,
        jax.random.normal(k_b1, (num_classes,), dtype=jnp.float32) * 0.1,
    ]

    out = linear_aggregator_forward(x, w, mlp_weights, mlp_biases, num_classes=num_classes)
    out = jax.block_until_ready(out)

    ref = reference_forward(x, w, mlp_weights, mlp_biases)
    assert out.shape == (batch_size, num_classes), out.shape
    assert jnp.allclose(out, ref, atol=1e-4, rtol=1e-4), (out, ref)

    print("KERNEL_OK")
</pallas_src>

<mosaic_0001>
module attributes {stable_mosaic.version = 11 : i64} {
  func.func @kernel(%arg0: i32, %arg1: memref<8x4x32xf32, #tpu.memory_space<vmem>>, %arg2: memref<1x4x32xf32, #tpu.memory_space<vmem>>, %arg3: memref<32x32xf32, #tpu.memory_space<vmem>>, %arg4: memref<1x32xf32, #tpu.memory_space<vmem>>, %arg5: memref<32x128xf32, #tpu.memory_space<vmem>>, %arg6: memref<1x128xf32, #tpu.memory_space<vmem>>, %arg7: memref<8x128xf32, #tpu.memory_space<vmem>>) attributes {dimension_semantics = [#tpu.dimension_semantics<parallel>], iteration_bounds = array<i64: 1>, scalar_prefetch = 0 : i64, scratch_operands = 0 : i64, tpu.core_type = #tpu.core_type<tc>, window_params = [{transform_indices = @transform_0, window_bounds = array<i64: 8, 4, 32>}, {pipeline_mode = #tpu.pipeline_mode<synchronous>, transform_indices = @transform_1, window_bounds = array<i64: 1, 4, 32>}, {pipeline_mode = #tpu.pipeline_mode<synchronous>, transform_indices = @transform_2, window_bounds = array<i64: 32, 32>}, {pipeline_mode = #tpu.pipeline_mode<synchronous>, transform_indices = @transform_3, window_bounds = array<i64: 1, 32>}, {pipeline_mode = #tpu.pipeline_mode<synchronous>, transform_indices = @transform_4, window_bounds = array<i64: 32, 128>}, {pipeline_mode = #tpu.pipeline_mode<synchronous>, transform_indices = @transform_5, window_bounds = array<i64: 1, 128>}, {transform_indices = @transform_6, window_bounds = array<i64: 8, 128>}]} {
    %c0 = arith.constant 0 : index
    %c0_0 = arith.constant 0 : index
    %c0_1 = arith.constant 0 : index
    %0 = vector.load %arg1[%c0, %c0_0, %c0_1] : memref<8x4x32xf32, #tpu.memory_space<vmem>>, vector<8x4x32xf32>
    %c0_2 = arith.constant 0 : index
    %c0_3 = arith.constant 0 : index
    %c0_4 = arith.constant 0 : index
    %1 = vector.load %arg2[%c0_2, %c0_3, %c0_4] : memref<1x4x32xf32, #tpu.memory_space<vmem>>, vector<1x4x32xf32>
    %2 = vector.broadcast %1 : vector<1x4x32xf32> to vector<8x4x32xf32>
    %3 = arith.mulf %0, %2 : vector<8x4x32xf32>
    %cst = arith.constant dense<0.000000e+00> : vector<8x32xf32>
    %4 = vector.multi_reduction <add>, %3, %cst [1] : vector<8x4x32xf32> to vector<8x32xf32>
    %c0_5 = arith.constant 0 : index
    %c0_6 = arith.constant 0 : index
    %5 = vector.load %arg3[%c0_5, %c0_6] : memref<32x32xf32, #tpu.memory_space<vmem>>, vector<32x32xf32>
    %c0_7 = arith.constant 0 : index
    %c0_8 = arith.constant 0 : index
    %6 = vector.load %arg4[%c0_7, %c0_8] : memref<1x32xf32, #tpu.memory_space<vmem>>, vector<1x32xf32>
    %cst_9 = arith.constant dense<0.000000e+00> : vector<8x32xf32>
    %7 = tpu.matmul %4, %5, %cst_9 {dimension_numbers = #tpu.dot_dimension_numbers<[1], [0], [0], [1], [0, 0, 1, 1], [], []>} : vector<8x32xf32>, vector<32x32xf32>, vector<8x32xf32> -> vector<8x32xf32>
    %8 = vector.broadcast %6 : vector<1x32xf32> to vector<8x32xf32>
    %9 = arith.addf %7, %8 : vector<8x32xf32>
    %cst_10 = arith.constant 0.000000e+00 : f32
    %10 = vector.broadcast %cst_10 : f32 to vector<8x32xf32>
    %11 = arith.maximumf %9, %10 : vector<8x32xf32>
    %c0_11 = arith.constant 0 : index
    %c0_12 = arith.constant 0 : index
    %12 = vector.load %arg5[%c0_11, %c0_12] : memref<32x128xf32, #tpu.memory_space<vmem>>, vector<32x128xf32>
    %c0_13 = arith.constant 0 : index
    %c0_14 = arith.constant 0 : index
    %13 = vector.load %arg6[%c0_13, %c0_14] : memref<1x128xf32, #tpu.memory_space<vmem>>, vector<1x128xf32>
    %cst_15 = arith.constant dense<0.000000e+00> : vector<8x128xf32>
    %14 = tpu.matmul %11, %12, %cst_15 {dimension_numbers = #tpu.dot_dimension_numbers<[1], [0], [0], [1], [0, 0, 1, 1], [], []>} : vector<8x32xf32>, vector<32x128xf32>, vector<8x128xf32> -> vector<8x128xf32>
    %15 = vector.broadcast %13 : vector<1x128xf32> to vector<8x128xf32>
    %16 = arith.addf %14, %15 : vector<8x128xf32>
    %c0_16 = arith.constant 0 : index
    %c0_17 = arith.constant 0 : index
    %17 = vector.load %arg7[%c0_16, %c0_17] : memref<8x128xf32, #tpu.memory_space<vmem>>, vector<8x128xf32>
    tpu.vector_store %arg7[%c0_16, %c0_17], %16 {strides = array<i32>} : memref<8x128xf32, #tpu.memory_space<vmem>>, vector<8x128xf32>,
    return
  }
  func.func @transform_0(%arg0: i32) -> (i32, i32, i32) {
    %c0_i32 = arith.constant 0 : i32
    %c0_i32_0 = arith.constant 0 : i32
    %c0_i32_1 = arith.constant 0 : i32
    return %arg0, %c0_i32, %c0_i32_0 : i32, i32, i32
  }
  func.func @transform_1(%arg0: i32) -> (i32, i32, i32) {
    %c0_i32 = arith.constant 0 : i32
    %c0_i32_0 = arith.constant 0 : i32
    %c0_i32_1 = arith.constant 0 : i32
    %c0_i32_2 = arith.constant 0 : i32
    return %c0_i32, %c0_i32_0, %c0_i32_1 : i32, i32, i32
  }
  func.func @transform_2(%arg0: i32) -> (i32, i32) {
    %c0_i32 = arith.constant 0 : i32
    %c0_i32_0 = arith.constant 0 : i32
    %c0_i32_1 = arith.constant 0 : i32
    return %c0_i32, %c0_i32_0 : i32, i32
  }
  func.func @transform_3(%arg0: i32) -> (i32, i32) {
    %c0_i32 = arith.constant 0 : i32
    %c0_i32_0 = arith.constant 0 : i32
    %c0_i32_1 = arith.constant 0 : i32
    return %c0_i32, %c0_i32_0 : i32, i32
  }
  func.func @transform_4(%arg0: i32) -> (i32, i32) {
    %c0_i32 = arith.constant 0 : i32
    %c0_i32_0 = arith.constant 0 : i32
    %c0_i32_1 = arith.constant 0 : i32
    return %c0_i32, %c0_i32_0 : i32, i32
  }
  func.func @transform_5(%arg0: i32) -> (i32, i32) {
    %c0_i32 = arith.constant 0 : i32
    %c0_i32_0 = arith.constant 0 : i32
    %c0_i32_1 = arith.constant 0 : i32
    return %c0_i32, %c0_i32_0 : i32, i32
  }
  func.func @transform_6(%arg0: i32) -> (i32, i32) {
    %c0_i32 = arith.constant 0 : i32
    %c0_i32_0 = arith.constant 0 : i32
    return %arg0, %c0_i32 : i32, i32
  }
}

</mosaic_0001>

<llo_original>
// kernel: linear_aggregator_forward.1
$region0: #{linear_aggregator_forward.1}
  #allocation0 [shape = 'u32[]', space=smem, size = 0x4, offset = 0x4, fixed_abs, tag = 'smem constant byte address 0x4 - core index']
  #allocation1 [shape = 'u32[144,128]{1,0:T(1,128)}', space=vmem, size = 0x12000, scoped, tag = 'internal scratch']
  %s0 = inlined_call_operand.vmem [shape: f32[8,4,32], index: 0, kind: input, shape index: {}]
  %s1 = inlined_call_operand.vmem [shape: f32[1,4,32], index: 1, kind: input, shape index: {}]
  %s2 = inlined_call_operand.vmem [shape: f32[32,32], index: 2, kind: input, shape index: {}]
  %s3 = inlined_call_operand.vmem [shape: f32[1,32], index: 3, kind: input, shape index: {}]
  %s4 = inlined_call_operand.vmem [shape: f32[32,128], index: 4, kind: input, shape index: {}]
  %s5 = inlined_call_operand.vmem [shape: f32[1,128], index: 5, kind: input, shape index: {}]
  %s6 = inlined_call_operand.vmem [shape: f32[8,128], index: 6, kind: output, shape index: {}]
  %s7 = sld [smem:[#allocation0]]
  $region34: #{linear_aggregator_forward.1} parent=0
    _
  %s9 = ssub.s32 1, %s7
  %s10 = scalar_select 0, %s9, %s7
  // Predicated region
  $region2: #{linear_aggregator_forward.1} parent=0 // pred_check
    _
  $region3: #{linear_aggregator_forward.1} parent=0 // pred_check_branch
    %12 = sbr.rel (0) target = $region5
  $region4: #{linear_aggregator_forward.1} parent=0 // pred_region
    _
  $region5: #{linear_aggregator_forward.1} parent=0 // pred_fallthru
    _
  // Predicated region
  $region6: #{linear_aggregator_forward.1} parent=0 // pred_check
    _
  $region7: #{linear_aggregator_forward.1} parent=0 // pred_check_branch
    %14 = sbr.rel (0) target = $region9
  $region8: #{linear_aggregator_forward.1} parent=0 // pred_region
    _
  $region9: #{linear_aggregator_forward.1} parent=0 // pred_fallthru
    _
  // Predicated region
  $region10: #{linear_aggregator_forward.1} parent=0 // pred_check
    _
  $region11: #{linear_aggregator_forward.1} parent=0 // pred_check_branch
    %16 = sbr.rel (0) target = $region13
  $region12: #{linear_aggregator_forward.1} parent=0 // pred_region
    _
  $region13: #{linear_aggregator_forward.1} parent=0 // pred_fallthru
    _
  // Predicated region
  $region14: #{linear_aggregator_forward.1} parent=0 // pred_check
    _
  $region15: #{linear_aggregator_forward.1} parent=0 // pred_check_branch
    %18 = sbr.rel (0) target = $region17
  $region16: #{linear_aggregator_forward.1} parent=0 // pred_region
    _
  $region17: #{linear_aggregator_forward.1} parent=0 // pred_fallthru
    _
  // Predicated region
  $region18: #{linear_aggregator_forward.1} parent=0 // pred_check
    _
  $region19: #{linear_aggregator_forward.1} parent=0 // pred_check_branch
    %20 = sbr.rel (0) target = $region21
  $region20: #{linear_aggregator_forward.1} parent=0 // pred_region
    _
  $region21: #{linear_aggregator_forward.1} parent=0 // pred_fallthru
    _
  // Predicated region
  $region22: #{linear_aggregator_forward.1} parent=0 // pred_check
    _
  $region23: #{linear_aggregator_forward.1} parent=0 // pred_check_branch
    %22 = sbr.rel (0) target = $region25
  $region24: #{linear_aggregator_forward.1} parent=0 // pred_region
    _
  $region25: #{linear_aggregator_forward.1} parent=0 // pred_fallthru
    _
  %v23 = vld [vmem:[%s0] sm:$0xf]
  %v24 = vld [vmem:[%s0 + $0x4] sm:$0xf]
  %v25 = vld [vmem:[%s0 + $0x8] sm:$0xf]
  %v26 = vld [vmem:[%s0 + $0xc] sm:$0xf]
  %v27 = vld [vmem:[%s0 + $0x10] sm:$0xf]
  %v28 = vld [vmem:[%s0 + $0x14] sm:$0xf]
  %v29 = vld [vmem:[%s0 + $0x18] sm:$0xf]
  %v30 = vld [vmem:[%s0 + $0x1c] sm:$0xf]
  %v31 = vld [vmem:[%s1] sm:$0xf]
  %v32 = vmul.f32 %v23, %v31
  %v33 = vmul.f32 %v24, %v31
  %v34 = vmul.f32 %v25, %v31
  %v35 = vmul.f32 %v26, %v31
  %v36 = vmul.f32 %v27, %v31
  %v37 = vmul.f32 %v28, %v31
  %v38 = vmul.f32 %v29, %v31
  %v39 = vmul.f32 %v30, %v31
  %vm40 = vcmask 257024
  %v41 = vsel %vm40, %v32, 0.0
  %v42 = vrot.slane %v41, 4
  %v43 = vadd.f32 %v41, %v42
  %v44 = vrot.slane %v43, 2
  %v45 = vadd.f32 %v43, %v44
  %v46 = vrot.slane %v45, 1
  %v47 = vadd.f32 %v45, %v46
  %v48 = vsel %vm40, %v33, 0.0
  %v49 = vrot.slane %v48, 4
  %v50 = vadd.f32 %v48, %v49
  %v51 = vrot.slane %v50, 2
  %v52 = vadd.f32 %v50, %v51
  %v53 = vrot.slane %v52, 1
  %v54 = vadd.f32 %v52, %v53
  %v55 = vsel %vm40, %v34, 0.0
  %v56 = vrot.slane %v55, 4
  %v57 = vadd.f32 %v55, %v56
  %v58 = vrot.slane %v57, 2
  %v59 = vadd.f32 %v57, %v58
  %v60 = vrot.slane %v59, 1
  %v61 = vadd.f32 %v59, %v60
  %v62 = vsel %vm40, %v35, 0.0
  %v63 = vrot.slane %v62, 4
  %v64 = vadd.f32 %v62, %v63
  %v65 = vrot.slane %v64, 2
  %v66 = vadd.f32 %v64, %v65
  %v67 = vrot.slane %v66, 1
  %v68 = vadd.f32 %v66, %v67
  %v69 = vsel %vm40, %v36, 0.0
  %v70 = vrot.slane %v69, 4
  %v71 = vadd.f32 %v69, %v70
  %v72 = vrot.slane %v71, 2
  %v73 = vadd.f32 %v71, %v72
  %v74 = vrot.slane %v73, 1
  %v75 = vadd.f32 %v73, %v74
  %v76 = vsel %vm40, %v37, 0.0
  %v77 = vrot.slane %v76, 4
  %v78 = vadd.f32 %v76, %v77
  %v79 = vrot.slane %v78, 2
  %v80 = vadd.f32 %v78, %v79
  %v81 = vrot.slane %v80, 1
  %v82 = vadd.f32 %v80, %v81
  %v83 = vsel %vm40, %v38, 0.0
  %v84 = vrot.slane %v83, 4
  %v85 = vadd.f32 %v83, %v84
  %v86 = vrot.slane %v85, 2
  %v87 = vadd.f32 %v85, %v86
  %v88 = vrot.slane %v87, 1
  %v89 = vadd.f32 %v87, %v88
  %v90 = vsel %vm40, %v39, 0.0
  %v91 = vrot.slane %v90, 4
  %v92 = vadd.f32 %v90, %v91
  %v93 = vrot.slane %v92, 2
  %v94 = vadd.f32 %v92, %v93
  %v95 = vrot.slane %v94, 1
  %v96 = vadd.f32 %v94, %v95
  %v97 = vld [vmem:[%s2] sm:$0xff]
  %v98 = vld [vmem:[%s2 + $0x8] sm:$0xff]
  %v99 = vld [vmem:[%s2 + $0x10] sm:$0xff]
  %v100 = vld [vmem:[%s2 + $0x18] sm:$0xff]
  %v101 = vld [vmem:[%s3] sm:$0x1]
  %v103 = vlaneseq
  %v104 = vshrl.u32 %v103, 7
  %v105 = vsub.s32 0, %v104
  %v106 = vrot.slane %v101, %v105
  %vm116 = vcmask 1041409
  %v117 = vsel %vm116, %v54, %v47
  %vm118 = vcmask 1042434
  %v119 = vsel %vm118, %v61, %v117
  %vm120 = vcmask 1043459
  %v121 = vsel %vm120, %v68, %v119
  %vm122 = vcmask 1044484
  %v123 = vsel %vm122, %v75, %v121
  %vm124 = vcmask 1045509
  %v125 = vsel %vm124, %v82, %v123
  %vm126 = vcmask 1046534
  %v127 = vsel %vm126, %v89, %v125
  %vm128 = vcmask 1047559
  %v129 = vsel %vm128, %v96, %v127
  %vm130 = vcmask 261120
  %v131 = vsel %vm130, %v129, 0
  %133 = vmatprep.subr.mxu0 0.0
  %134 = vmatpush1.msra.mxu0 0.0
  %135 = vmatprep.subr.mxu0 0.0
  %136 = vmatpush1.msra.mxu0 0.0
  %137 = vmatprep.subr.mxu0 0.0
  %138 = vmatpush1.msra.mxu0 0.0
  %139 = vmatprep.subr.mxu0 0.0
  %140 = vmatpush1.msra.mxu0 0.0
  %141 = vmatprep.subr.mxu0 0.0
  %142 = vmatpush1.msra.mxu0 0.0
  %143 = vmatprep.subr.mxu0 0.0
  %144 = vmatpush1.msra.mxu0 0.0
  %145 = vmatprep.subr.mxu0 0.0
  %146 = vmatpush1.msra.mxu0 0.0
  %147 = vmatprep.subr.mxu0 0.0
  %148 = vmatpush1.msra.mxu0 0.0
  %149 = vmatprep.subr.mxu0 0.0
  %150 = vmatpush1.msra.mxu0 0.0
  %151 = vmatprep.subr.mxu0 0.0
  %152 = vmatpush1.msra.mxu0 0.0
  %153 = vmatprep.subr.mxu0 0.0
  %154 = vmatpush1.msra.mxu0 0.0
  %155 = vmatprep.subr.mxu0 0.0
  %156 = vmatpush1.msra.mxu0 0.0
  %157 = vmatprep.subr.mxu0 0.0
  %158 = vmatpush1.msra.mxu0 %v100
  %159 = vmatprep.subr.mxu0 0.0
  %160 = vmatpush1.msra.mxu0 %v99
  %161 = vmatprep.subr.mxu0 0.0
  %162 = vmatpush1.msra.mxu0 %v98
  %163 = vmatprep.subr.mxu0 0.0
  %164 = vmatpush1.msra.mxu0 %v97
  %165 = vmatprep.subr.mxu0 0.0
  %166 = vmatpush2.msra.mxu0 0.0
  %167 = vmatprep.subr.mxu0 0.0
  %168 = vmatpush2.msra.mxu0 0.0
  %169 = vmatprep.subr.mxu0 0.0
  %170 = vmatpush2.msra.mxu0 0.0
  %171 = vmatprep.subr.mxu0 0.0
  %172 = vmatpush2.msra.mxu0 0.0
  %173 = vmatprep.subr.mxu0 0.0
  %174 = vmatpush2.msra.mxu0 0.0
  %175 = vmatprep.subr.mxu0 0.0
  %176 = vmatpush2.msra.mxu0 0.0
  %177 = vmatprep.subr.mxu0 0.0
  %178 = vmatpush2.msra.mxu0 0.0
  %179 = vmatprep.subr.mxu0 0.0
  %180 = vmatpush2.msra.mxu0 0.0
  %181 = vmatprep.subr.mxu0 0.0
  %182 = vmatpush2.msra.mxu0 0.0
  %183 = vmatprep.subr.mxu0 0.0
  %184 = vmatpush2.msra.mxu0 0.0
  %185 = vmatprep.subr.mxu0 0.0
  %186 = vmatpush2.msra.mxu0 0.0
  %187 = vmatprep.subr.mxu0 0.0
  %188 = vmatpush2.msra.mxu0 0.0
  %189 = vmatprep.subr.mxu0 0.0
  %190 = vmatpush2.msra.mxu0 0.0
  %191 = vmatprep.subr.mxu0 0.0
  %192 = vmatpush2.msra.mxu0 0.0
  %193 = vmatprep.subr.mxu0 0.0
  %194 = vmatpush2.msra.mxu0 0.0
  %195 = vmatprep.subr.mxu0 0.0
  %196 = vmatpush2.msra.mxu0 0.0
  %197 = vmatprep.mubr.f32.mxu0 0.0
  %198 = vmatmul.mubr.f32.gmra.mxu0 %v131
  %v199 = vpop.f32.mrf.mxu0
  %v200 = vadd.f32 %v106, %v199
  %v201 = vpop.f32.mrf.mxu0
  %202 = vdwg.mxu0
  %v203 = vmax.f32 %v200, 0.0
  %v204 = vld [vmem:[%s4] sm:$0xff]
  %v205 = vld [vmem:[%s4 + $0x8] sm:$0xff]
  %v206 = vld [vmem:[%s4 + $0x10] sm:$0xff]
  %v207 = vld [vmem:[%s4 + $0x18] sm:$0xff]
  %v208 = vld [vmem:[%s5] sm:$0x1]
  %v210 = vlaneseq
  %v211 = vshrl.u32 %v210, 7
  %v212 = vsub.s32 0, %v211
  %v213 = vrot.slane %v208, %v212
  %v216 = vsel %vm130, %v203, 0
  %218 = vmatprep.subr.mxu0 0.0
  %219 = vmatpush1.msra.mxu0 0.0
  %220 = vmatprep.subr.mxu0 0.0
  %221 = vmatpush1.msra.mxu0 0.0
  %222 = vmatprep.subr.mxu0 0.0
  %223 = vmatpush1.msra.mxu0 0.0
  %224 = vmatprep.subr.mxu0 0.0
  %225 = vmatpush1.msra.mxu0 0.0
  %226 = vmatprep.subr.mxu0 0.0
  %227 = vmatpush1.msra.mxu0 0.0
  %228 = vmatprep.subr.mxu0 0.0
  %229 = vmatpush1.msra.mxu0 0.0
  %230 = vmatprep.subr.mxu0 0.0
  %231 = vmatpush1.msra.mxu0 0.0
  %232 = vmatprep.subr.mxu0 0.0
  %233 = vmatpush1.msra.mxu0 0.0
  %234 = vmatprep.subr.mxu0 0.0
  %235 = vmatpush1.msra.mxu0 0.0
  %236 = vmatprep.subr.mxu0 0.0
  %237 = vmatpush1.msra.mxu0 0.0
  %238 = vmatprep.subr.mxu0 0.0
  %239 = vmatpush1.msra.mxu0 0.0
  %240 = vmatprep.subr.mxu0 0.0
  %241 = vmatpush1.msra.mxu0 0.0
  %242 = vmatprep.subr.mxu0 0.0
  %243 = vmatpush1.msra.mxu0 %v207
  %244 = vmatprep.subr.mxu0 0.0
  %245 = vmatpush1.msra.mxu0 %v206
  %246 = vmatprep.subr.mxu0 0.0
  %247 = vmatpush1.msra.mxu0 %v205
  %248 = vmatprep.subr.mxu0 0.0
  %249 = vmatpush1.msra.mxu0 %v204
  %250 = vmatprep.subr.mxu0 0.0
  %251 = vmatpush2.msra.mxu0 0.0
  %252 = vmatprep.subr.mxu0 0.0
  %253 = vmatpush2.msra.mxu0 0.0
  %254 = vmatprep.subr.mxu0 0.0
  %255 = vmatpush2.msra.mxu0 0.0
  %256 = vmatprep.subr.mxu0 0.0
  %257 = vmatpush2.msra.mxu0 0.0
  %258 = vmatprep.subr.mxu0 0.0
  %259 = vmatpush2.msra.mxu0 0.0
  %260 = vmatprep.subr.mxu0 0.0
  %261 = vmatpush2.msra.mxu0 0.0
  %262 = vmatprep.subr.mxu0 0.0
  %263 = vmatpush2.msra.mxu0 0.0
  %264 = vmatprep.subr.mxu0 0.0
  %265 = vmatpush2.msra.mxu0 0.0
  %266 = vmatprep.subr.mxu0 0.0
  %267 = vmatpush2.msra.mxu0 0.0
  %268 = vmatprep.subr.mxu0 0.0
  %269 = vmatpush2.msra.mxu0 0.0
  %270 = vmatprep.subr.mxu0 0.0
  %271 = vmatpush2.msra.mxu0 0.0
  %272 = vmatprep.subr.mxu0 0.0
  %273 = vmatpush2.msra.mxu0 0.0
  %274 = vmatprep.subr.mxu0 0.0
  %275 = vmatpush2.msra.mxu0 0.0
  %276 = vmatprep.subr.mxu0 0.0
  %277 = vmatpush2.msra.mxu0 0.0
  %278 = vmatprep.subr.mxu0 0.0
  %279 = vmatpush2.msra.mxu0 0.0
  %280 = vmatprep.subr.mxu0 0.0
  %281 = vmatpush2.msra.mxu0 0.0
  %282 = vmatprep.mubr.f32.mxu0 0.0
  %283 = vmatmul.mubr.f32.gmra.mxu0 %v216
  %v284 = vpop.f32.mrf.mxu0
  %v285 = vadd.f32 %v213, %v284
  %v286 = vpop.f32.mrf.mxu0
  %287 = vdwg.mxu0
  %288 = vst [vmem:[%s6] sm:$0xff] %v285
  // Predicated region
  $region26: #{linear_aggregator_forward.1} parent=0 // pred_check
    _
  $region27: #{linear_aggregator_forward.1} parent=0 // pred_check_branch
    %290 = sbr.rel (0) target = $region29
  $region28: #{linear_aggregator_forward.1} parent=0 // pred_region
    _
  $region29: #{linear_aggregator_forward.1} parent=0 // pred_fallthru
    _
  // Predicated region
  $region30: #{linear_aggregator_forward.1} parent=0 // pred_check
    _
  $region31: #{linear_aggregator_forward.1} parent=0 // pred_check_branch
    %292 = sbr.rel (0) target = $region33
  $region32: #{linear_aggregator_forward.1} parent=0 // pred_region
    _
  $region33: #{linear_aggregator_forward.1} parent=0 // pred_fallthru
    _

</llo_original>
